<compile_context>
chip_gen: v7x
topology: tpu7x:2x2x1
jax: 0.10.0
libtpu: 0.0.40
codegen_flags: <defaults>
</compile_context>

<pallas_src>
import functools

import jax
import jax.numpy as jnp
from jax.experimental import pallas as pl
from jax.experimental.pallas import tpu as pltpu


def _qconv_kernel(x_ref, w_ref, shift_ref, o_ref, patches_ref, *, KH, KW, W, L):
    """One image: fused valid-conv (stride 1) + BN shift + ReLU.

    x_ref:       (1, Cin, H*W)      flattened native-NCHW image
    w_ref:       (Cout, KH*KW*Cin)  conv weight with BN scale folded in
    shift_ref:   (Cout, 1)          BN shift (beta - mean*scale)
    o_ref:       (1, Cout, Ho*W)    lane-dense output slab (spatial on lanes)
    patches_ref: (KH*KW*Cin, L)     VMEM scratch for the in-kernel im2col
    """
    Cin = x_ref.shape[1]
    # In-kernel im2col: patch row (kh*KW + kw)*Cin + c holds
    # x[c, m + kh*W + kw] for m in [0, L).  Every window stays in bounds
    # (max offset + L == H*W), and every valid output position m = ho*W + wo
    # (ho < Ho, wo < Wo) lies in [0, L).
    for kh in range(KH):
        for kw in range(KW):
            s = kh * W + kw
            t = kh * KW + kw
            patches_ref[pl.ds(t * Cin, Cin), :] = x_ref[0, :, pl.ds(s, L)]

    # Single MXU dot with the full contraction depth K = KH*KW*Cin.
    acc = jnp.dot(w_ref[...], patches_ref[...],
                  preferred_element_type=jnp.float32)          # (Cout, L)
    acc = acc + shift_ref[...]                                 # eval-mode BN shift
    o_ref[0, :, pl.ds(0, L)] = jnp.maximum(acc, 0.0).astype(o_ref.dtype)
    # Lanes [L, Ho*W) of the output block are never valid conv outputs; the
    # wrapper's [..., :Wo] slice drops them, so they are left unwritten.


def fold_bn_into_weights(weight_oihw, gamma, beta, running_mean, running_var,
                         eps=1e-5):
    """Once-per-weight-update prep (hoisted out of the per-call path).

    Folds the eval-mode BatchNorm scale into the conv weight and returns
    (w_ck, shift_col) in the layout the kernel consumes.
    """
    Cout, Cin, KH, KW = weight_oihw.shape
    scale = gamma / jnp.sqrt(running_var + eps)                # (Cout,)
    shift = beta - running_mean * scale                        # (Cout,)
    # (Cout, KH, KW, Cin) -> (Cout, KH*KW*Cin): tap-major then cin, matching
    # the in-kernel patch row order.
    w_ck = (jnp.transpose(weight_oihw, (0, 2, 3, 1))
            .reshape(Cout, KH * KW * Cin) * scale[:, None]).astype(jnp.float32)
    shift_col = shift.reshape(Cout, 1).astype(jnp.float32)
    return w_ck, shift_col


@functools.partial(jax.jit, static_argnames=("kernel_size",))
def qconv2d_forward(x_nchw, w_ck, shift_col, *, kernel_size=(3, 3)):
    """Conv2d(no bias, stride=1, pad=0, groups=1) -> BatchNorm2d(eval) -> ReLU."""
    N, Cin, H, W = x_nchw.shape
    KH, KW = kernel_size
    Cout, K = w_ck.shape
    assert K == KH * KW * Cin
    Ho, Wo = H - KH + 1, W - KW + 1
    HW = H * W
    M_out = Ho * W                      # lane-dense output slab width (>= Ho*Wo)
    L = M_out - (KW - 1)                # lane positions computed per image

    # Native NCHW layout; this reshape is free (no transpose, no im2col copy).
    x_flat = x_nchw.reshape(N, Cin, HW).astype(jnp.float32)

    kernel = functools.partial(_qconv_kernel, KH=KH, KW=KW, W=W, L=L)

    out = pl.pallas_call(
        kernel,
        out_shape=jax.ShapeDtypeStruct((N, Cout, M_out), jnp.float32),
        grid_spec=pltpu.PrefetchScalarGridSpec(
            num_scalar_prefetch=0,
            grid=(N,),
            in_specs=[
                pl.BlockSpec((1, Cin, HW), lambda n: (n, 0, 0)),
                pl.BlockSpec((Cout, K), lambda n: (0, 0)),     # VMEM-resident
                pl.BlockSpec((Cout, 1), lambda n: (0, 0)),     # VMEM-resident
            ],
            out_specs=pl.BlockSpec((1, Cout, M_out), lambda n: (n, 0, 0)),
            scratch_shapes=[pltpu.VMEM((K, L), jnp.float32)],
        ),
        compiler_params=pltpu.CompilerParams(
            dimension_semantics=("parallel",)),   # one image per TensorCore
    )(x_flat, w_ck, shift_col)

    # (N, Cout, Ho*W) -> (N, Cout, Ho, Wo): free reshape + width slice,
    # no output transpose.
    out = out.reshape(N, Cout, Ho, W)[:, :, :, :Wo]
    return out.astype(x_nchw.dtype)


def _reference(x_nchw, weight_oihw, gamma, beta, running_mean, running_var,
               eps=1e-5):
    y = jax.lax.conv_general_dilated(
        x_nchw, weight_oihw, window_strides=(1, 1), padding="VALID",
        dimension_numbers=("NCHW", "OIHW", "NCHW"))
    inv = gamma / jnp.sqrt(running_var + eps)
    y = y * inv[None, :, None, None] + (beta - running_mean * inv)[None, :, None, None]
    return jnp.maximum(y, 0.0)


if __name__ == "__main__":
    key = jax.random.PRNGKey(0)
    kx, kw, kg, kb, km, kv = jax.random.split(key, 6)

    # qconv2d(in_channels=4, out_channels=8, kernel_size=3, padding=0,
    #         bias=None, norm=True, act=True, qat=False)
    N, Cin, H, W = 2, 4, 16, 16
    Cout, Kk = 8, 3

    x = jax.random.normal(kx, (N, Cin, H, W), dtype=jnp.float32)
    weight = jax.random.normal(kw, (Cout, Cin, Kk, Kk), dtype=jnp.float32) * 0.1

    # Non-trivial eval-mode BN parameters / running stats (exercises fusion).
    gamma = 1.0 + 0.1 * jax.random.normal(kg, (Cout,), jnp.float32)
    beta = 0.1 * jax.random.normal(kb, (Cout,), jnp.float32)
    running_mean = 0.1 * jax.random.normal(km, (Cout,), jnp.float32)
    running_var = 1.0 + 0.1 * jax.random.uniform(kv, (Cout,), jnp.float32)

    # Weight-side prep is hoisted: done once per weight update, reused for
    # every forward call.
    w_ck, shift_col = fold_bn_into_weights(weight, gamma, beta,
                                           running_mean, running_var)

    out = qconv2d_forward(x, w_ck, shift_col, kernel_size=(Kk, Kk))
    out = jax.block_until_ready(out)

    ref = _reference(x, weight, gamma, beta, running_mean, running_var)
    assert out.shape == (N, Cout, H - Kk + 1, W - Kk + 1)
    assert jnp.allclose(out, ref, atol=1e-4, rtol=1e-4)

    print("KERNEL_OK")
</pallas_src>

<mosaic_0001>
module attributes {stable_mosaic.version = 11 : i64} {
  func.func @_qconv_kernel(%arg0: i32, %arg1: memref<1x4x256xf32, #tpu.memory_space<vmem>>, %arg2: memref<8x36xf32, #tpu.memory_space<vmem>>, %arg3: memref<8x1xf32, #tpu.memory_space<vmem>>, %arg4: memref<1x8x224xf32, #tpu.memory_space<vmem>>, %arg5: memref<36x222xf32, #tpu.memory_space<vmem>>) attributes {dimension_semantics = [#tpu.dimension_semantics<parallel>], iteration_bounds = array<i64: 2>, scalar_prefetch = 0 : i64, scratch_operands = 1 : i64, tpu.core_type = #tpu.core_type<tc>, window_params = [{transform_indices = @transform_0, window_bounds = array<i64: 1, 4, 256>}, {pipeline_mode = #tpu.pipeline_mode<synchronous>, transform_indices = @transform_1, window_bounds = array<i64: 8, 36>}, {pipeline_mode = #tpu.pipeline_mode<synchronous>, transform_indices = @transform_2, window_bounds = array<i64: 8, 1>}, {transform_indices = @transform_3, window_bounds = array<i64: 1, 8, 224>}]} {
    %c0 = arith.constant 0 : index
    %c0_0 = arith.constant 0 : index
    %c0_1 = arith.constant 0 : index
    %0 = vector.load %arg1[%c0, %c0_0, %c0_1] : memref<1x4x256xf32, #tpu.memory_space<vmem>>, vector<1x4x222xf32>
    %1 = vector.shape_cast %0 : vector<1x4x222xf32> to vector<4x222xf32>
    %c0_2 = arith.constant 0 : index
    %c0_3 = arith.constant 0 : index
    %2 = vector.load %arg5[%c0_2, %c0_3] : memref<36x222xf32, #tpu.memory_space<vmem>>, vector<4x222xf32>
    tpu.vector_store %arg5[%c0_2, %c0_3], %1 {strides = array<i32>} : memref<36x222xf32, #tpu.memory_space<vmem>>, vector<4x222xf32>,
    %c0_4 = arith.constant 0 : index
    %c0_5 = arith.constant 0 : index
    %c1 = arith.constant 1 : index
    %3 = vector.load %arg1[%c0_4, %c0_5, %c1] : memref<1x4x256xf32, #tpu.memory_space<vmem>>, vector<1x4x222xf32>
    %4 = vector.shape_cast %3 : vector<1x4x222xf32> to vector<4x222xf32>
    %c4 = arith.constant 4 : index
    %c0_6 = arith.constant 0 : index
    %5 = vector.load %arg5[%c4, %c0_6] : memref<36x222xf32, #tpu.memory_space<vmem>>, vector<4x222xf32>
    tpu.vector_store %arg5[%c4, %c0_6], %4 {strides = array<i32>} : memref<36x222xf32, #tpu.memory_space<vmem>>, vector<4x222xf32>,
    %c0_7 = arith.constant 0 : index
    %c0_8 = arith.constant 0 : index
    %c2 = arith.constant 2 : index
    %6 = vector.load %arg1[%c0_7, %c0_8, %c2] : memref<1x4x256xf32, #tpu.memory_space<vmem>>, vector<1x4x222xf32>
    %7 = vector.shape_cast %6 : vector<1x4x222xf32> to vector<4x222xf32>
    %c8 = arith.constant 8 : index
    %c0_9 = arith.constant 0 : index
    %8 = vector.load %arg5[%c8, %c0_9] : memref<36x222xf32, #tpu.memory_space<vmem>>, vector<4x222xf32>
    tpu.vector_store %arg5[%c8, %c0_9], %7 {strides = array<i32>} : memref<36x222xf32, #tpu.memory_space<vmem>>, vector<4x222xf32>,
    %c0_10 = arith.constant 0 : index
    %c0_11 = arith.constant 0 : index
    %c16 = arith.constant 16 : index
    %9 = vector.load %arg1[%c0_10, %c0_11, %c16] : memref<1x4x256xf32, #tpu.memory_space<vmem>>, vector<1x4x222xf32>
    %10 = vector.shape_cast %9 : vector<1x4x222xf32> to vector<4x222xf32>
    %c12 = arith.constant 12 : index
    %c0_12 = arith.constant 0 : index
    %11 = vector.load %arg5[%c12, %c0_12] : memref<36x222xf32, #tpu.memory_space<vmem>>, vector<4x222xf32>
    tpu.vector_store %arg5[%c12, %c0_12], %10 {strides = array<i32>} : memref<36x222xf32, #tpu.memory_space<vmem>>, vector<4x222xf32>,
    %c0_13 = arith.constant 0 : index
    %c0_14 = arith.constant 0 : index
    %c17 = arith.constant 17 : index
    %12 = vector.load %arg1[%c0_13, %c0_14, %c17] : memref<1x4x256xf32, #tpu.memory_space<vmem>>, vector<1x4x222xf32>
    %13 = vector.shape_cast %12 : vector<1x4x222xf32> to vector<4x222xf32>
    %c16_15 = arith.constant 16 : index
    %c0_16 = arith.constant 0 : index
    %14 = vector.load %arg5[%c16_15, %c0_16] : memref<36x222xf32, #tpu.memory_space<vmem>>, vector<4x222xf32>
    tpu.vector_store %arg5[%c16_15, %c0_16], %13 {strides = array<i32>} : memref<36x222xf32, #tpu.memory_space<vmem>>, vector<4x222xf32>,
    %c0_17 = arith.constant 0 : index
    %c0_18 = arith.constant 0 : index
    %c18 = arith.constant 18 : index
    %15 = vector.load %arg1[%c0_17, %c0_18, %c18] : memref<1x4x256xf32, #tpu.memory_space<vmem>>, vector<1x4x222xf32>
    %16 = vector.shape_cast %15 : vector<1x4x222xf32> to vector<4x222xf32>
    %c20 = arith.constant 20 : index
    %c0_19 = arith.constant 0 : index
    %17 = vector.load %arg5[%c20, %c0_19] : memref<36x222xf32, #tpu.memory_space<vmem>>, vector<4x222xf32>
    tpu.vector_store %arg5[%c20, %c0_19], %16 {strides = array<i32>} : memref<36x222xf32, #tpu.memory_space<vmem>>, vector<4x222xf32>,
    %c0_20 = arith.constant 0 : index
    %c0_21 = arith.constant 0 : index
    %c32 = arith.constant 32 : index
    %18 = vector.load %arg1[%c0_20, %c0_21, %c32] : memref<1x4x256xf32, #tpu.memory_space<vmem>>, vector<1x4x222xf32>
    %19 = vector.shape_cast %18 : vector<1x4x222xf32> to vector<4x222xf32>
    %c24 = arith.constant 24 : index
    %c0_22 = arith.constant 0 : index
    %20 = vector.load %arg5[%c24, %c0_22] : memref<36x222xf32, #tpu.memory_space<vmem>>, vector<4x222xf32>
    tpu.vector_store %arg5[%c24, %c0_22], %19 {strides = array<i32>} : memref<36x222xf32, #tpu.memory_space<vmem>>, vector<4x222xf32>,
    %c0_23 = arith.constant 0 : index
    %c0_24 = arith.constant 0 : index
    %c33 = arith.constant 33 : index
    %21 = vector.load %arg1[%c0_23, %c0_24, %c33] : memref<1x4x256xf32, #tpu.memory_space<vmem>>, vector<1x4x222xf32>
    %22 = vector.shape_cast %21 : vector<1x4x222xf32> to vector<4x222xf32>
    %c28 = arith.constant 28 : index
    %c0_25 = arith.constant 0 : index
    %23 = vector.load %arg5[%c28, %c0_25] : memref<36x222xf32, #tpu.memory_space<vmem>>, vector<4x222xf32>
    tpu.vector_store %arg5[%c28, %c0_25], %22 {strides = array<i32>} : memref<36x222xf32, #tpu.memory_space<vmem>>, vector<4x222xf32>,
    %c0_26 = arith.constant 0 : index
    %c0_27 = arith.constant 0 : index
    %c34 = arith.constant 34 : index
    %24 = vector.load %arg1[%c0_26, %c0_27, %c34] : memref<1x4x256xf32, #tpu.memory_space<vmem>>, vector<1x4x222xf32>
    %25 = vector.shape_cast %24 : vector<1x4x222xf32> to vector<4x222xf32>
    %c32_28 = arith.constant 32 : index
    %c0_29 = arith.constant 0 : index
    %26 = vector.load %arg5[%c32_28, %c0_29] : memref<36x222xf32, #tpu.memory_space<vmem>>, vector<4x222xf32>
    tpu.vector_store %arg5[%c32_28, %c0_29], %25 {strides = array<i32>} : memref<36x222xf32, #tpu.memory_space<vmem>>, vector<4x222xf32>,
    %c0_30 = arith.constant 0 : index
    %c0_31 = arith.constant 0 : index
    %27 = vector.load %arg2[%c0_30, %c0_31] : memref<8x36xf32, #tpu.memory_space<vmem>>, vector<8x36xf32>
    %c0_32 = arith.constant 0 : index
    %c0_33 = arith.constant 0 : index
    %28 = vector.load %arg5[%c0_32, %c0_33] : memref<36x222xf32, #tpu.memory_space<vmem>>, vector<36x222xf32>
    %cst = arith.constant dense<0.000000e+00> : vector<8x222xf32>
    %29 = tpu.matmul %27, %28, %cst {dimension_numbers = #tpu.dot_dimension_numbers<[1], [0], [0], [1], [0, 0, 1, 1], [], []>} : vector<8x36xf32>, vector<36x222xf32>, vector<8x222xf32> -> vector<8x222xf32>
    %c0_34 = arith.constant 0 : index
    %c0_35 = arith.constant 0 : index
    %30 = vector.load %arg3[%c0_34, %c0_35] : memref<8x1xf32, #tpu.memory_space<vmem>>, vector<8x1xf32>
    %31 = vector.broadcast %30 : vector<8x1xf32> to vector<8x222xf32>
    %32 = arith.addf %29, %31 : vector<8x222xf32>
    %cst_36 = arith.constant 0.000000e+00 : f32
    %33 = vector.broadcast %cst_36 : f32 to vector<8x222xf32>
    %34 = arith.maximumf %32, %33 : vector<8x222xf32>
    %c0_37 = arith.constant 0 : index
    %c0_38 = arith.constant 0 : index
    %c0_39 = arith.constant 0 : index
    %35 = vector.load %arg4[%c0_37, %c0_38, %c0_39] : memref<1x8x224xf32, #tpu.memory_space<vmem>>, vector<1x8x222xf32>
    %36 = vector.shape_cast %35 : vector<1x8x222xf32> to vector<8x222xf32>
    %37 = vector.shape_cast %34 : vector<8x222xf32> to vector<1x8x222xf32>
    tpu.vector_store %arg4[%c0_37, %c0_38, %c0_39], %37 {strides = array<i32>} : memref<1x8x224xf32, #tpu.memory_space<vmem>>, vector<1x8x222xf32>,
    return
  }
  func.func @transform_0(%arg0: i32) -> (i32, i32, i32) {
    %c0_i32 = arith.constant 0 : i32
    %c0_i32_0 = arith.constant 0 : i32
    %c0_i32_1 = arith.constant 0 : i32
    return %arg0, %c0_i32, %c0_i32_0 : i32, i32, i32
  }
  func.func @transform_1(%arg0: i32) -> (i32, i32) {
    %c0_i32 = arith.constant 0 : i32
    %c0_i32_0 = arith.constant 0 : i32
    %c0_i32_1 = arith.constant 0 : i32
    return %c0_i32, %c0_i32_0 : i32, i32
  }
  func.func @transform_2(%arg0: i32) -> (i32, i32) {
    %c0_i32 = arith.constant 0 : i32
    %c0_i32_0 = arith.constant 0 : i32
    %c0_i32_1 = arith.constant 0 : i32
    return %c0_i32, %c0_i32_0 : i32, i32
  }
  func.func @transform_3(%arg0: i32) -> (i32, i32, i32) {
    %c0_i32 = arith.constant 0 : i32
    %c0_i32_0 = arith.constant 0 : i32
    %c0_i32_1 = arith.constant 0 : i32
    return %arg0, %c0_i32, %c0_i32_0 : i32, i32, i32
  }
}

</mosaic_0001>

<llo_original>
// kernel: qconv2d_forward.1
$region0: #{qconv2d_forward.1}
  #allocation0 [shape = 'u32[]', space=smem, size = 0x4, offset = 0x4, fixed_abs, tag = 'smem constant byte address 0x4 - core index']
  #allocation1 [shape = 'u32[144,128]{1,0:T(1,128)}', space=vmem, size = 0x12000, scoped, tag = 'internal scratch']
  #allocation2 [shape = 'f32[36,222]{1,0:T(8,128)}', space=vmem, size = 0xa000, scoped, tag = 'scratch operand']
  %s0 = inlined_call_operand.vmem [shape: f32[2,4,256], index: 0, kind: input, shape index: {}]
  %s1 = inlined_call_operand.vmem [shape: f32[8,36], index: 1, kind: input, shape index: {}]
  %s2 = inlined_call_operand.vmem [shape: f32[8,1], index: 2, kind: input, shape index: {}]
  %s3 = inlined_call_operand.vmem [shape: f32[2,8,224], index: 3, kind: output, shape index: {}]
  %s4 = sld [smem:[#allocation0]]
  $region45: #{qconv2d_forward.1} parent=0
    _
  %s6 = ssub.s32 1, %s4
  %s7 = scalar_select 0, %s6, %s4
  loop: start=0, step=1, limit=4
  $region2: #{qconv2d_forward.1} parent=0 // loop_pre_header
    _
  $region3: #{qconv2d_forward.1} parent=0 // loop_header
    %s9 = sphi 0, %s13
    %p10 = scmp.ge.s32.totalorder %s9, 4
    %s19 = sphi 0, %s21
    %s22 = sphi 0, %s19
    %s23 = sphi 0, %s22
    %s39 = sphi 0, %s23
    %s43 = sphi 0, %s43
    %s45 = sphi 0, %s43
    %s46 = sphi 0, %s45
    %s60 = sphi 0, %s46
    %s64 = sphi 0, %s64
    %s66 = sphi 0, %s64
    %s67 = sphi 0, %s66
    %s81 = sphi 0, %s67
    %s87 = sphi 0, %s89
    %s90 = sphi 0, %s87
    %s91 = sphi 0, %s90
    %s107 = sphi 0, %s91
  $region4: #{qconv2d_forward.1} parent=0 // loop_header_branch
    %12 = sbr.rel (%p10) target = $region8
  $region5: #{qconv2d_forward.1} parent=0 // loop_body
    %s14 = ssub.s32 %s9, 1
    %s15 = ssub.s32 %s9, 2
    %s16 = sadd.s32 %s9, 1
    %s17 = ssub.s32 %s9, %s16
    %p18 = scmp.eq.s32.totalorder %s17, 0
    %s20 = sadd.s32 %s19, 1
    %s21 = scalar_select %p18, %s19, %s20
    %p24 = pneg %p18
    %p25 = scmp.eq.s32.totalorder %s9, 1
    %p26 = por %p24, %p25
    %p27 = scmp.ne.s32.totalorder %s19, %s22
    %p28 = scmp.eq.s32.totalorder %s9, 0
    %p29 = por %p27, %p28
    %p30 = scmp.ne.s32.totalorder %s19, %s22
    %p31 = scmp.eq.s32.totalorder %s14, 1
    %p32 = por %p30, %p31
    %p33 = scmp.ne.s32.totalorder %s22, %s23
    %p34 = scmp.eq.s32.totalorder %s14, 0
    %p35 = por %p33, %p34
    %p36 = scmp.ne.s32.totalorder %s22, %s23
    %p37 = scmp.eq.s32.totalorder %s15, 1
    %p38 = por %p36, %p37
    %p40 = scmp.ne.s32.totalorder %s23, %s39
    %p41 = scmp.eq.s32.totalorder %s15, 0
    %p42 = por %p40, %p41
    %s44 = sadd.s32 %s43, 1
    %p47 = scmp.eq.s32.totalorder %s9, 1
    %p48 = scmp.ne.s32.totalorder %s43, %s45
    %p49 = scmp.eq.s32.totalorder %s9, 0
    %p50 = por %p48, %p49
    %p51 = scmp.ne.s32.totalorder %s43, %s45
    %p52 = scmp.eq.s32.totalorder %s14, 1
    %p53 = por %p51, %p52
    %p54 = scmp.ne.s32.totalorder %s45, %s46
    %p55 = scmp.eq.s32.totalorder %s14, 0
    %p56 = por %p54, %p55
    %p57 = scmp.ne.s32.totalorder %s45, %s46
    %p58 = scmp.eq.s32.totalorder %s15, 1
    %p59 = por %p57, %p58
    %p61 = scmp.ne.s32.totalorder %s46, %s60
    %p62 = scmp.eq.s32.totalorder %s15, 0
    %p63 = por %p61, %p62
    %s65 = sadd.s32 %s64, 1
    %p68 = scmp.eq.s32.totalorder %s9, 1
    %p69 = scmp.ne.s32.totalorder %s64, %s66
    %p70 = scmp.eq.s32.totalorder %s9, 0
    %p71 = por %p69, %p70
    %p72 = scmp.ne.s32.totalorder %s64, %s66
    %p73 = scmp.eq.s32.totalorder %s14, 1
    %p74 = por %p72, %p73
    %p75 = scmp.ne.s32.totalorder %s66, %s67
    %p76 = scmp.eq.s32.totalorder %s14, 0
    %p77 = por %p75, %p76
    %p78 = scmp.ne.s32.totalorder %s66, %s67
    %p79 = scmp.eq.s32.totalorder %s15, 1
    %p80 = por %p78, %p79
    %p82 = scmp.ne.s32.totalorder %s67, %s81
    %p83 = scmp.eq.s32.totalorder %s15, 0
    %p84 = por %p82, %p83
    %s85 = ssub.s32 %s9, %s16
    %p86 = scmp.eq.s32.totalorder %s85, 0
    %s88 = sadd.s32 %s87, 1
    %s89 = scalar_select %p86, %s87, %s88
    %p92 = pneg %p86
    %p93 = scmp.eq.s32.totalorder %s9, 1
    %p94 = por %p92, %p93
    %p95 = scmp.ne.s32.totalorder %s87, %s90
    %p96 = scmp.eq.s32.totalorder %s9, 0
    %p97 = por %p95, %p96
    %p98 = scmp.ne.s32.totalorder %s87, %s90
    %p99 = scmp.eq.s32.totalorder %s14, 1
    %p100 = por %p98, %p99
    %p101 = scmp.ne.s32.totalorder %s90, %s91
    %p102 = scmp.eq.s32.totalorder %s14, 0
    %p103 = por %p101, %p102
    %p104 = scmp.ne.s32.totalorder %s90, %s91
    %p105 = scmp.eq.s32.totalorder %s15, 1
    %p106 = por %p104, %p105
    %p108 = scmp.ne.s32.totalorder %s91, %s107
    %p109 = scmp.eq.s32.totalorder %s15, 0
    %p110 = por %p108, %p109
    %p111 = scmp.le.s32.totalorder 1, %s9
    %p112 = scmp.lt.s32.totalorder %s9, 3
    %p113 = pnand %p111, %p112
    %p114 = pneg %p113
    // Predicated region
    $region9: #{qconv2d_forward.1} parent=5 // pred_check
      _
    $region10: #{qconv2d_forward.1} parent=5 // pred_check_branch
      %116 = sbr.rel (%p113) target = $region12
    $region11: #{qconv2d_forward.1} parent=5 // pred_region
      %s117 = ssub.s32 %s9, 1
      // Predicated region
      $region13: #{qconv2d_forward.1} parent=11 // pred_check
        %p118 = pneg %p56
      $region14: #{qconv2d_forward.1} parent=11 // pred_check_branch
        %120 = sbr.rel (%p118) target = $region16
      $region15: #{qconv2d_forward.1} parent=11 // pred_region
        _
      $region16: #{qconv2d_forward.1} parent=11 // pred_fallthru
        _
      // Predicated region
      $region17: #{qconv2d_forward.1} parent=11 // pred_check
        %p121 = pneg %p77
      $region18: #{qconv2d_forward.1} parent=11 // pred_check_branch
        %123 = sbr.rel (%p121) target = $region20
      $region19: #{qconv2d_forward.1} parent=11 // pred_region
        _
      $region20: #{qconv2d_forward.1} parent=11 // pred_fallthru
        _
    $region12: #{qconv2d_forward.1} parent=5 // pred_fallthru
      _
    %p124 = scmp.lt.s32.totalorder %s9, 2
    // Predicated region
    $region21: #{qconv2d_forward.1} parent=5 // pred_check
      %p125 = pneg %p124
    $region22: #{qconv2d_forward.1} parent=5 // pred_check_branch
      %127 = sbr.rel (%p125) target = $region24
    $region23: #{qconv2d_forward.1} parent=5 // pred_region
      // Predicated region
      $region25: #{qconv2d_forward.1} parent=23 // pred_check
        %p128 = pneg %p29
      $region26: #{qconv2d_forward.1} parent=23 // pred_check_branch
        %130 = sbr.rel (%p128) target = $region28
      $region27: #{qconv2d_forward.1} parent=23 // pred_region
        %p131 = scmp.lt.s32.totalorder %s9, 1
        %s132 = scalar_select %p131, %s9, 1
        %s133 = smul.addr %s132, 2
        %s134 = smul.addr %s133, 4
        %s135 = scalar_lea.vmem %s0, %s134
      $region28: #{qconv2d_forward.1} parent=23 // pred_fallthru
        _
    $region24: #{qconv2d_forward.1} parent=5 // pred_fallthru
      _
    %p136 = scmp.le.s32.totalorder 1, %s9
    %p137 = scmp.lt.s32.totalorder %s9, 3
    %p138 = pnand %p136, %p137
    %p139 = pneg %p138
    // Predicated region
    $region29: #{qconv2d_forward.1} parent=5 // pred_check
      _
    $region30: #{qconv2d_forward.1} parent=5 // pred_check_branch
      %141 = sbr.rel (%p138) target = $region32
    $region31: #{qconv2d_forward.1} parent=5 // pred_region
      %s142 = ssub.s32 %s9, 1
      %p143 = scmp.lt.s32.totalorder %s14, 1
      %s144 = scalar_select %p143, %s14, 1
      %s145 = smul.addr %s144, 2
      %s146 = smul.addr %s145, 4
      %s147 = scalar_lea.vmem %s0, %s146
      %p148 = pneg %p35
      %p149 = pneg %p32
      %p150 = pneg %p56
      %p151 = pneg %p53
      %p152 = pneg %p77
      %p153 = pneg %p74
      %p154 = pneg %p103
      %p155 = pneg %p100
      %p156 = scmp.lt.s32.totalorder %s14, 1
      %s157 = scalar_select %p156, %s14, 1
      %s158 = smul.addr %s157, 2
      %s159 = smul.addr %s158, 8
      %s160 = scalar_lea.vmem %s3, %s159
      %p161 = scmp.lt.s32.totalorder %s14, 1
      %s162 = scalar_select %p161, %s14, 1
      %s163 = smul.addr %s162, 2
      %s164 = smul.addr %s163, 4
      %s165 = scalar_lea.vmem %s0, %s164
      %p166 = scmp.lt.s32.totalorder %s14, 1
      %s167 = scalar_select %p166, %s14, 1
      %s168 = smul.addr %s167, 2
      %s169 = smul.addr %s168, 8
      %s170 = scalar_lea.vmem %s3, %s169
      %v171 = vld [vmem:[%s165] sm:$0xff]
      %v173 = vcombine.high %v171, %v171
      %175 = vst [vmem:[#allocation2] sm:$0xf] %v171
      %vm176 = vcmask 764928
      %177 = vst.msk [vmem:[#allocation2 + $0x8] sm:$0xf] %vm176, %v173
      %v178 = vld [vmem:[%s165] sm:$0xff]
      %v180 = vcombine.low %v178, %v178
      %181 = vrot.lane.b32.xlu0 %v180, 127
      %v182 = vpop.permute.xlu0 %181
      %183 = vrot.lane.b32.xlu0 %v178, 127
      %v184 = vpop.permute.xlu0 %183
      %vm185 = vcmask 1039360
      %v186 = vsel %vm185, %v182, %v184
      %189 = vst [vmem:[#allocation2] sm:$0xf0] %v186
      %vm190 = vcmask 769028
      %191 = vst.msk [vmem:[#allocation2 + $0x8] sm:$0xf0] %vm190, %v184
      %v192 = vld [vmem:[%s165] sm:$0xff]
      %v194 = vcombine.high %v192, %v192
      %195 = vrot.lane.b32.xlu0 %v192, 126
      %v196 = vpop.permute.xlu0 %195
      %197 = vrot.lane.b32.xlu0 %v194, 126
      %v198 = vpop.permute.xlu0 %197
      %vm199 = vcmask 1031168
      %v200 = vsel %vm199, %v196, %v198
      %203 = vst [vmem:[#allocation2 + $0x10] sm:$0xf] %v200
      %204 = vst.msk [vmem:[#allocation2 + $0x18] sm:$0xf] %vm176, %v198
      %v205 = vld [vmem:[%s165] sm:$0xff]
      %v207 = vcombine.low %v205, %v205
      %208 = vrot.lane.b32.xlu0 %v207, 112
      %v209 = vpop.permute.xlu0 %208
      %210 = vrot.lane.b32.xlu0 %v205, 112
      %v211 = vpop.permute.xlu0 %210
      %vm212 = vcmask 916480
      %v213 = vsel %vm212, %v209, %v211
      %216 = vst [vmem:[#allocation2 + $0x10] sm:$0xf0] %v213
      %217 = vst.msk [vmem:[#allocation2 + $0x18] sm:$0xf0] %vm190, %v211
      %v218 = vld [vmem:[%s165] sm:$0xff]
      %v220 = vcombine.high %v218, %v218
      %221 = vrot.lane.b32.xlu0 %v218, 111
      %v222 = vpop.permute.xlu0 %221
      %223 = vrot.lane.b32.xlu0 %v220, 111
      %v224 = vpop.permute.xlu0 %223
      %vm225 = vcmask 908288
      %v226 = vsel %vm225, %v222, %v224
      %229 = vst [vmem:[#allocation2 + $0x20] sm:$0xf] %v226
      %230 = vst.msk [vmem:[#allocation2 + $0x28] sm:$0xf] %vm176, %v224
      %v231 = vld [vmem:[%s165] sm:$0xff]
      %v233 = vcombine.low %v231, %v231
      %234 = vrot.lane.b32.xlu0 %v233, 110
      %v235 = vpop.permute.xlu0 %234
      %236 = vrot.lane.b32.xlu0 %v231, 110
      %v237 = vpop.permute.xlu0 %236
      %vm238 = vcmask 900096
      %v239 = vsel %vm238, %v235, %v237
      %242 = vst [vmem:[#allocation2 + $0x20] sm:$0xf0] %v239
      %243 = vst.msk [vmem:[#allocation2 + $0x28] sm:$0xf0] %vm190, %v237
      %v244 = vld [vmem:[%s165] sm:$0xff]
      %v246 = vcombine.high %v244, %v244
      %247 = vrot.lane.b32.xlu0 %v244, 96
      %v248 = vpop.permute.xlu0 %247
      %249 = vrot.lane.b32.xlu0 %v246, 96
      %v250 = vpop.permute.xlu0 %249
      %vm251 = vcmask 785408
      %v252 = vsel %vm251, %v248, %v250
      %255 = vst [vmem:[#allocation2 + $0x30] sm:$0xf] %v252
      %256 = vst.msk [vmem:[#allocation2 + $0x38] sm:$0xf] %vm176, %v250
      %v257 = vld [vmem:[%s165] sm:$0xff]
      %v259 = vcombine.low %v257, %v257
      %260 = vrot.lane.b32.xlu0 %v259, 95
      %v261 = vpop.permute.xlu0 %260
      %262 = vrot.lane.b32.xlu0 %v257, 95
      %v263 = vpop.permute.xlu0 %262
      %vm264 = vcmask 777216
      %v265 = vsel %vm264, %v261, %v263
      %268 = vst [vmem:[#allocation2 + $0x30] sm:$0xf0] %v265
      %269 = vst.msk [vmem:[#allocation2 + $0x38] sm:$0xf0] %vm190, %v263
      %v270 = vld [vmem:[%s165] sm:$0xff]
      %v272 = vcombine.high %v270, %v270
      %273 = vrot.lane.b32.xlu0 %v270, 94
      %v274 = vpop.permute.xlu0 %273
      %275 = vrot.lane.b32.xlu0 %v272, 94
      %v276 = vpop.permute.xlu0 %275
      %vm277 = vcmask 769024
      %v278 = vsel %vm277, %v274, %v276
      %281 = vst [vmem:[#allocation2 + $0x40] sm:$0xf] %v278
      %282 = vst.msk [vmem:[#allocation2 + $0x48] sm:$0xf] %vm176, %v276
      %v283 = vld [vmem:[%s1] sm:$0xff]
      %v284 = vld [vmem:[#allocation2] sm:$0xff]
      %v285 = vld [vmem:[#allocation2 + $0x8] sm:$0xff]
      %v286 = vld [vmem:[#allocation2 + $0x10] sm:$0xff]
      %v287 = vld [vmem:[#allocation2 + $0x18] sm:$0xff]
      %v288 = vld [vmem:[#allocation2 + $0x20] sm:$0xff]
      %v289 = vld [vmem:[#allocation2 + $0x28] sm:$0xff]
      %v290 = vld [vmem:[#allocation2 + $0x30] sm:$0xff]
      %v291 = vld [vmem:[#allocation2 + $0x38] sm:$0xff]
      %v292 = vld [vmem:[#allocation2 + $0x40] sm:$0xf]
      %v293 = vld [vmem:[#allocation2 + $0x48] sm:$0xf]
      %v294 = vld [vmem:[%s2] sm:$0xff]
      %296 = vset.pattern.permute.xlu0 0
      %297 = vperm.xlu0 %296, %v294
      %v298 = vpop.permute.xlu0 %297
      %vm300 = vcmask 293888
      %v302 = vsel %vm300, %v283, 0
      %vm304 = vcmask 1043456
      %v306 = vsel %vm304, %v292, 0
      %v309 = vsel %vm304, %v293, 0
      %311 = vmatprep.subr.mxu0 %v285
      %312 = vmatpush1.msra.mxu0 %v284
      %313 = vmatprep.subr.mxu0 %v287
      %314 = vmatpush1.msra.mxu0 %v286
      %315 = vmatprep.subr.mxu0 %v289
      %316 = vmatpush1.msra.mxu0 %v288
      %317 = vmatprep.subr.mxu0 %v291
      %318 = vmatpush1.msra.mxu0 %v290
      %319 = vmatprep.subr.mxu0 %v309
      %320 = vmatpush1.msra.mxu0 %v306
      %321 = vmatprep.subr.mxu0 0.0
      %322 = vmatpush1.msra.mxu0 0.0
      %323 = vmatprep.subr.mxu0 0.0
      %324 = vmatpush1.msra.mxu0 0.0
      %325 = vmatprep.subr.mxu0 0.0
      %326 = vmatpush1.msra.mxu0 0.0
      %327 = vmatprep.subr.mxu0 0.0
      %328 = vmatpush1.msra.mxu0 0.0
      %329 = vmatprep.subr.mxu0 0.0
      %330 = vmatpush1.msra.mxu0 0.0
      %331 = vmatprep.subr.mxu0 0.0
      %332 = vmatpush1.msra.mxu0 0.0
      %333 = vmatprep.subr.mxu0 0.0
      %334 = vmatpush1.msra.mxu0 0.0
      %335 = vmatprep.subr.mxu0 0.0
      %336 = vmatpush1.msra.mxu0 0.0
      %337 = vmatprep.subr.mxu0 0.0
      %338 = vmatpush1.msra.mxu0 0.0
      %339 = vmatprep.subr.mxu0 0.0
      %340 = vmatpush1.msra.mxu0 0.0
      %341 = vmatprep.subr.mxu0 0.0
      %342 = vmatpush1.msra.mxu0 0.0
      %343 = vmatprep.subr.mxu0 0.0
      %344 = vmatpush1.msra.mxu0 0.0
      %345 = vmatprep.subr.mxu0 0.0
      %346 = vmatpush1.msra.mxu0 0.0
      %347 = vmatprep.subr.mxu0 0.0
      %348 = vmatpush1.msra.mxu0 0.0
      %349 = vmatprep.subr.mxu0 0.0
      %350 = vmatpush1.msra.mxu0 0.0
      %351 = vmatprep.subr.mxu0 0.0
      %352 = vmatpush1.msra.mxu0 0.0
      %353 = vmatprep.subr.mxu0 0.0
      %354 = vmatpush1.msra.mxu0 0.0
      %355 = vmatprep.subr.mxu0 0.0
      %356 = vmatpush1.msra.mxu0 0.0
      %357 = vmatprep.subr.mxu0 0.0
      %358 = vmatpush1.msra.mxu0 0.0
      %359 = vmatprep.subr.mxu0 0.0
      %360 = vmatpush1.msra.mxu0 0.0
      %361 = vmatprep.subr.mxu0 0.0
      %362 = vmatpush1.msra.mxu0 0.0
      %363 = vmatprep.subr.mxu0 0.0
      %364 = vmatpush1.msra.mxu0 0.0
      %365 = vmatprep.subr.mxu0 0.0
      %366 = vmatpush1.msra.mxu0 0.0
      %367 = vmatprep.subr.mxu0 0.0
      %368 = vmatpush1.msra.mxu0 0.0
      %369 = vmatprep.subr.mxu0 0.0
      %370 = vmatpush1.msra.mxu0 0.0
      %371 = vmatprep.subr.mxu0 0.0
      %372 = vmatpush1.msra.mxu0 0.0
      %373 = vmatprep.subr.mxu0 0.0
      %374 = vmatpush1.msra.mxu0 0.0
      %375 = vmatprep.mubr.f32.mxu0 0.0
      %376 = vmatmul.mubr.f32.gmra.mrb[0].mxu0 %v302
      %v377 = vpop.f32.mrb[0].mxu0
      %v378 = vadd.f32 %v298, %v377
      %v379 = vpop.f32.mrb[0].mxu0
      %v380 = vadd.f32 %v298, %v379
      %381 = vdwg.mxu0
      %v382 = vmax.f32 %v378, 0.0
      %v383 = vmax.f32 %v380, 0.0
      %384 = vst [vmem:[%s170] sm:$0xff] %v382
      %385 = vst.msk [vmem:[%s170 + $0x8] sm:$0xff] %vm277, %v383
      %p386 = scmp.lt.s32.totalorder %s14, 1
      %s387 = scalar_select %p386, %s14, 1
      %s388 = smul.addr %s387, 2
      %s389 = smul.addr %s388, 8
      %s390 = scalar_lea.vmem %s3, %s389
      // Predicated region
      $region33: #{qconv2d_forward.1} parent=31 // pred_check
        %p391 = pneg %p100
      $region34: #{qconv2d_forward.1} parent=31 // pred_check_branch
        %393 = sbr.rel (%p391) target = $region36
      $region35: #{qconv2d_forward.1} parent=31 // pred_region
        _
      $region36: #{qconv2d_forward.1} parent=31 // pred_fallthru
        _
    $region32: #{qconv2d_forward.1} parent=5 // pred_fallthru
      _
    %p394 = scmp.le.s32.totalorder 2, %s9
    // Predicated region
    $region37: #{qconv2d_forward.1} parent=5 // pred_check
      %p395 = pneg %p394
    $region38: #{qconv2d_forward.1} parent=5 // pred_check_branch
      %397 = sbr.rel (%p395) target = $region40
    $region39: #{qconv2d_forward.1} parent=5 // pred_region
      %s398 = ssub.s32 %s9, 2
      // Predicated region
      $region41: #{qconv2d_forward.1} parent=39 // pred_check
        %p399 = pneg %p106
      $region42: #{qconv2d_forward.1} parent=39 // pred_check_branch
        %401 = sbr.rel (%p399) target = $region44
      $region43: #{qconv2d_forward.1} parent=39 // pred_region
        %p402 = scmp.lt.s32.totalorder %s15, 1
        %s403 = scalar_select %p402, %s15, 1
        %s404 = smul.addr %s403, 2
        %s405 = smul.addr %s404, 8
        %s406 = scalar_lea.vmem %s3, %s405
      $region44: #{qconv2d_forward.1} parent=39 // pred_fallthru
        _
    $region40: #{qconv2d_forward.1} parent=5 // pred_fallthru
      _
  $region6: #{qconv2d_forward.1} parent=0 // loop_footer
    %s13 = sadd.s32 1, %s9
  $region7: #{qconv2d_forward.1} parent=0 // loop_footer_branch
    %8 = sbr.rel target = $region3
  $region8: #{qconv2d_forward.1} parent=0 // loop_exit
    _

</llo_original>
